<compile_context>
chip_gen: v7x
topology: tpu7x:2x2x1
jax: 0.10.0
libtpu: 0.0.40
codegen_flags: <defaults>
</compile_context>

<pallas_src>
import functools

import jax
import jax.numpy as jnp
from jax import lax
from jax.experimental import pallas as pl
from jax.experimental.pallas import tpu as pltpu

# MLP dims from the PyTorch module: 16 -> 64 -> 32 -> 16 -> 8 -> 1
DIMS = (16, 64, 32, 16, 8, 1)

# Packed-parameter layout (see prepare_params):
#   w_packed : bf16 (128, 64) -- W1..W4, every slice 16-row aligned (bf16 packing)
#   aux      : f32  (152, 1)  -- b1..b4 (b4 zero-padded to 16 rows), w5 column
#                                (zero-padded to 16 rows), b5.
_W_ROWS = 128
_AUX_ROWS = 152


def _round_up(n, m):
    return ((n + m - 1) // m) * m


def mlp_kernel(x_ref, w_ref, aux_ref, o_ref):
    """Fused 5-layer MLP; activations are feature-major (features, tile_b)."""
    x = x_ref[...]                                           # (tb, 16) bf16

    # Layer 1 (16 -> 64): contract the 16-feature axis of both operands
    # (i.e. W1 @ x.T) so the wrapper never materializes a transposed copy of x
    # in HBM; Mosaic handles the transposed MXU operand in VMEM.
    h = lax.dot_general(w_ref[0:64, 0:16], x,
                        dimension_numbers=(((1,), (1,)), ((), ())),
                        preferred_element_type=jnp.float32)  # (64, tb) f32
    h = jnp.maximum(h + aux_ref[0:64, :], 0.0).astype(jnp.bfloat16)

    # Layer 2 (64 -> 32)
    h = jnp.dot(w_ref[64:96, 0:64], h, preferred_element_type=jnp.float32)
    h = jnp.maximum(h + aux_ref[64:96, :], 0.0).astype(jnp.bfloat16)

    # Layer 3 (32 -> 16)
    h = jnp.dot(w_ref[96:112, 0:32], h, preferred_element_type=jnp.float32)
    h = jnp.maximum(h + aux_ref[96:112, :], 0.0).astype(jnp.bfloat16)

    # Layer 4 (16 -> 8), zero-padded to 16 output rows so the bf16 weight slice
    # stays 16-row aligned; padded rows are exactly 0 after bias-add + ReLU.
    h = jnp.dot(w_ref[112:128, 0:16], h, preferred_element_type=jnp.float32)
    h = jnp.maximum(h + aux_ref[112:128, :], 0.0)            # (16, tb) f32

    # Layer 5 (8 -> 1): an MXU dot with N=1 wastes the systolic array, so run
    # it on the VPU (broadcast multiply) + XLU (sublane reduce).  w5 is padded
    # to 16 rows with zeros to match the padded layer-4 output.
    out = jnp.sum(aux_ref[128:144, :] * h, axis=0, keepdims=True)
    out = out + aux_ref[144:145, :]                          # + b5
    o_ref[...] = out.astype(o_ref.dtype)                     # (1, tb) lane-dense


def prepare_params(params):
    """Pack PyTorch-layout params [(W (out,in) f32, b (out,) f32), ...] into the
    two resident kernel arrays.  Call ONCE and reuse — keeps the f32->bf16 cast
    and the packing out of the per-forward path."""
    (w1, b1), (w2, b2), (w3, b3), (w4, b4), (w5, b5) = params

    wp = jnp.zeros((_W_ROWS, 64), jnp.float32)
    wp = wp.at[0:64, 0:16].set(w1)
    wp = wp.at[64:96, 0:64].set(w2)
    wp = wp.at[96:112, 0:32].set(w3)
    wp = wp.at[112:120, 0:16].set(w4)
    w_packed = wp.astype(jnp.bfloat16)

    aux = jnp.zeros((_AUX_ROWS, 1), jnp.float32)
    aux = aux.at[0:64, 0].set(b1)
    aux = aux.at[64:96, 0].set(b2)
    aux = aux.at[96:112, 0].set(b3)
    aux = aux.at[112:120, 0].set(b4)
    aux = aux.at[128:136, 0].set(w5[0, :])    # w5 is (1, 8) in nn.Linear layout
    aux = aux.at[144, 0].set(b5[0])
    return w_packed, aux


@functools.partial(jax.jit, static_argnames=("tile_b",))
def mlp_forward(x, w_packed, aux, *, tile_b=4096):
    """x: (B, 16) f32; (w_packed, aux) from prepare_params. Returns (B, 1) f32."""
    B, d_in = x.shape
    assert d_in == DIMS[0]

    # Lane tile: multiple of 512 (keeps the 256-wide MXU N feed and bf16 lane
    # packing full on v6e/v7x), big enough to amortize the ~600-cycle per-step
    # pipeline overhead, but capped so the grid has >= 2 steps whenever
    # B > 512 so both v7x TensorCores are fed.
    tb = min(_round_up(tile_b, 512), max(512, _round_up(-(-B // 2), 512)))
    b_pad = _round_up(B, tb)

    # Keep x batch-major in HBM (no transpose); pad + cast fuse under jit.
    x_p = jnp.pad(x, ((0, b_pad - B), (0, 0))).astype(jnp.bfloat16)

    flops_per_row = 2 * sum(a * b for a, b in zip(DIMS[:-1], DIMS[1:]))  # 7440
    param_bytes = int(w_packed.size) * 2 + int(aux.size) * 4
    cost = pl.CostEstimate(
        flops=b_pad * flops_per_row,
        transcendentals=0,
        bytes_accessed=b_pad * (DIMS[0] * 2 + DIMS[-1] * 4) + param_bytes,
    )

    out_t = pl.pallas_call(
        mlp_kernel,
        out_shape=jax.ShapeDtypeStruct((1, b_pad), jnp.float32),
        grid_spec=pltpu.PrefetchScalarGridSpec(
            num_scalar_prefetch=0,
            grid=(b_pad // tb,),
            in_specs=[
                pl.BlockSpec((tb, DIMS[0]), lambda i: (i, 0)),      # x tile
                pl.BlockSpec((_W_ROWS, 64), lambda i: (0, 0)),      # weights (resident)
                pl.BlockSpec((_AUX_ROWS, 1), lambda i: (0, 0)),     # biases/w5/b5
            ],
            out_specs=pl.BlockSpec((1, tb), lambda i: (0, i)),
        ),
        compiler_params=pltpu.CompilerParams(
            dimension_semantics=("parallel",)),
        cost_estimate=cost,
    )(x_p, w_packed, aux)

    return out_t[:, :B].T   # (B, 1), matching the PyTorch forward


def init_params(key):
    """Deterministic init mimicking nn.Linear (W: (out, in), b: (out,))."""
    params = []
    for idx, (d_in, d_out) in enumerate(zip(DIMS[:-1], DIMS[1:])):
        k_w, k_b, key = jax.random.split(jax.random.fold_in(key, idx), 3)
        bound = 1.0 / jnp.sqrt(d_in)
        w = jax.random.uniform(k_w, (d_out, d_in), jnp.float32, -bound, bound)
        b = jax.random.uniform(k_b, (d_out,), jnp.float32, -bound, bound)
        params.append((w, b))
    return params


def mlp_reference(x, params):
    """Pure-JAX f32 reference with PyTorch nn.Linear semantics (y = x @ W.T + b)."""
    h = x
    for i, (w, b) in enumerate(params):
        h = h @ w.T + b
        if i < len(params) - 1:
            h = jnp.maximum(h, 0.0)
    return h


if __name__ == "__main__":
    key = jax.random.PRNGKey(0)
    k_x, k_p = jax.random.split(key)

    B = 1000  # not a multiple of the tile to exercise the padding path
    x = jax.random.normal(k_x, (B, DIMS[0]), jnp.float32)
    params = init_params(k_p)
    w_packed, aux = prepare_params(params)   # one-time pack + bf16 cast

    out = mlp_forward(x, w_packed, aux)      # tb=512, padded batch 1024 -> 2 steps
    out = jax.block_until_ready(out)

    ref = mlp_reference(x, params)
    assert out.shape == (B, 1)
    # bf16 weights/inputs in the kernel (f32 accumulate) -> looser tolerance
    # than the pure-f32 reference path.
    assert jnp.allclose(out, ref, atol=5e-2, rtol=5e-2), "mismatch vs reference"

    print("KERNEL_OK")
</pallas_src>

<mosaic_0001>
module attributes {stable_mosaic.version = 11 : i64} {
  func.func @mlp_kernel(%arg0: i32, %arg1: memref<512x16xbf16, #tpu.memory_space<vmem>>, %arg2: memref<128x64xbf16, #tpu.memory_space<vmem>>, %arg3: memref<152x1xf32, #tpu.memory_space<vmem>>, %arg4: memref<1x512xf32, #tpu.memory_space<vmem>>) attributes {dimension_semantics = [#tpu.dimension_semantics<parallel>], iteration_bounds = array<i64: 2>, scalar_prefetch = 0 : i64, scratch_operands = 0 : i64, tpu.core_type = #tpu.core_type<tc>, window_params = [{transform_indices = @transform_0, window_bounds = array<i64: 512, 16>}, {pipeline_mode = #tpu.pipeline_mode<synchronous>, transform_indices = @transform_1, window_bounds = array<i64: 128, 64>}, {pipeline_mode = #tpu.pipeline_mode<synchronous>, transform_indices = @transform_2, window_bounds = array<i64: 152, 1>}, {transform_indices = @transform_3, window_bounds = array<i64: 1, 512>}]} {
    %c0 = arith.constant 0 : index
    %c0_0 = arith.constant 0 : index
    %0 = vector.load %arg1[%c0, %c0_0] : memref<512x16xbf16, #tpu.memory_space<vmem>>, vector<512x16xbf16>
    %c0_1 = arith.constant 0 : index
    %c0_2 = arith.constant 0 : index
    %1 = vector.load %arg2[%c0_1, %c0_2] : memref<128x64xbf16, #tpu.memory_space<vmem>>, vector<64x16xbf16>
    %cst = arith.constant dense<0.000000e+00> : vector<64x512xf32>
    %2 = tpu.matmul %1, %0, %cst {dimension_numbers = #tpu.dot_dimension_numbers<[1], [1], [0], [0], [0, 0, 1, 0], [], []>} : vector<64x16xbf16>, vector<512x16xbf16>, vector<64x512xf32> -> vector<64x512xf32>
    %c0_3 = arith.constant 0 : index
    %c0_4 = arith.constant 0 : index
    %3 = vector.load %arg3[%c0_3, %c0_4] : memref<152x1xf32, #tpu.memory_space<vmem>>, vector<64x1xf32>
    %4 = vector.broadcast %3 : vector<64x1xf32> to vector<64x512xf32>
    %5 = arith.addf %2, %4 : vector<64x512xf32>
    %cst_5 = arith.constant 0.000000e+00 : f32
    %6 = vector.broadcast %cst_5 : f32 to vector<64x512xf32>
    %7 = arith.maximumf %5, %6 : vector<64x512xf32>
    %8 = arith.truncf %7 : vector<64x512xf32> to vector<64x512xbf16>
    %c64 = arith.constant 64 : index
    %c0_6 = arith.constant 0 : index
    %9 = vector.load %arg2[%c64, %c0_6] : memref<128x64xbf16, #tpu.memory_space<vmem>>, vector<32x64xbf16>
    %cst_7 = arith.constant dense<0.000000e+00> : vector<32x512xf32>
    %10 = tpu.matmul %9, %8, %cst_7 {dimension_numbers = #tpu.dot_dimension_numbers<[1], [0], [0], [1], [0, 0, 1, 1], [], []>} : vector<32x64xbf16>, vector<64x512xbf16>, vector<32x512xf32> -> vector<32x512xf32>
    %c64_8 = arith.constant 64 : index
    %c0_9 = arith.constant 0 : index
    %11 = vector.load %arg3[%c64_8, %c0_9] : memref<152x1xf32, #tpu.memory_space<vmem>>, vector<32x1xf32>
    %12 = vector.broadcast %11 : vector<32x1xf32> to vector<32x512xf32>
    %13 = arith.addf %10, %12 : vector<32x512xf32>
    %cst_10 = arith.constant 0.000000e+00 : f32
    %14 = vector.broadcast %cst_10 : f32 to vector<32x512xf32>
    %15 = arith.maximumf %13, %14 : vector<32x512xf32>
    %16 = arith.truncf %15 : vector<32x512xf32> to vector<32x512xbf16>
    %c96 = arith.constant 96 : index
    %c0_11 = arith.constant 0 : index
    %17 = vector.load %arg2[%c96, %c0_11] : memref<128x64xbf16, #tpu.memory_space<vmem>>, vector<16x32xbf16>
    %cst_12 = arith.constant dense<0.000000e+00> : vector<16x512xf32>
    %18 = tpu.matmul %17, %16, %cst_12 {dimension_numbers = #tpu.dot_dimension_numbers<[1], [0], [0], [1], [0, 0, 1, 1], [], []>} : vector<16x32xbf16>, vector<32x512xbf16>, vector<16x512xf32> -> vector<16x512xf32>
    %c96_13 = arith.constant 96 : index
    %c0_14 = arith.constant 0 : index
    %19 = vector.load %arg3[%c96_13, %c0_14] : memref<152x1xf32, #tpu.memory_space<vmem>>, vector<16x1xf32>
    %20 = vector.broadcast %19 : vector<16x1xf32> to vector<16x512xf32>
    %21 = arith.addf %18, %20 : vector<16x512xf32>
    %cst_15 = arith.constant 0.000000e+00 : f32
    %22 = vector.broadcast %cst_15 : f32 to vector<16x512xf32>
    %23 = arith.maximumf %21, %22 : vector<16x512xf32>
    %24 = arith.truncf %23 : vector<16x512xf32> to vector<16x512xbf16>
    %c112 = arith.constant 112 : index
    %c0_16 = arith.constant 0 : index
    %25 = vector.load %arg2[%c112, %c0_16] : memref<128x64xbf16, #tpu.memory_space<vmem>>, vector<16x16xbf16>
    %cst_17 = arith.constant dense<0.000000e+00> : vector<16x512xf32>
    %26 = tpu.matmul %25, %24, %cst_17 {dimension_numbers = #tpu.dot_dimension_numbers<[1], [0], [0], [1], [0, 0, 1, 1], [], []>} : vector<16x16xbf16>, vector<16x512xbf16>, vector<16x512xf32> -> vector<16x512xf32>
    %c112_18 = arith.constant 112 : index
    %c0_19 = arith.constant 0 : index
    %27 = vector.load %arg3[%c112_18, %c0_19] : memref<152x1xf32, #tpu.memory_space<vmem>>, vector<16x1xf32>
    %28 = vector.broadcast %27 : vector<16x1xf32> to vector<16x512xf32>
    %29 = arith.addf %26, %28 : vector<16x512xf32>
    %cst_20 = arith.constant 0.000000e+00 : f32
    %30 = vector.broadcast %cst_20 : f32 to vector<16x512xf32>
    %31 = arith.maximumf %29, %30 : vector<16x512xf32>
    %c128 = arith.constant 128 : index
    %c0_21 = arith.constant 0 : index
    %32 = vector.load %arg3[%c128, %c0_21] : memref<152x1xf32, #tpu.memory_space<vmem>>, vector<16x1xf32>
    %33 = vector.broadcast %32 : vector<16x1xf32> to vector<16x512xf32>
    %34 = arith.mulf %33, %31 : vector<16x512xf32>
    %cst_22 = arith.constant dense<0.000000e+00> : vector<512xf32>
    %35 = vector.multi_reduction <add>, %34, %cst_22 [0] : vector<16x512xf32> to vector<512xf32>
    %36 = vector.shape_cast %35 : vector<512xf32> to vector<1x512xf32>
    %c144 = arith.constant 144 : index
    %c0_23 = arith.constant 0 : index
    %37 = vector.load %arg3[%c144, %c0_23] : memref<152x1xf32, #tpu.memory_space<vmem>>, vector<1x1xf32>
    %38 = vector.broadcast %37 : vector<1x1xf32> to vector<1x512xf32>
    %39 = arith.addf %36, %38 : vector<1x512xf32>
    %c0_24 = arith.constant 0 : index
    %c0_25 = arith.constant 0 : index
    %40 = vector.load %arg4[%c0_24, %c0_25] : memref<1x512xf32, #tpu.memory_space<vmem>>, vector<1x512xf32>
    tpu.vector_store %arg4[%c0_24, %c0_25], %39 {strides = array<i32>} : memref<1x512xf32, #tpu.memory_space<vmem>>, vector<1x512xf32>,
    return
  }
  func.func @transform_0(%arg0: i32) -> (i32, i32) {
    %c0_i32 = arith.constant 0 : i32
    %c0_i32_0 = arith.constant 0 : i32
    return %arg0, %c0_i32 : i32, i32
  }
  func.func @transform_1(%arg0: i32) -> (i32, i32) {
    %c0_i32 = arith.constant 0 : i32
    %c0_i32_0 = arith.constant 0 : i32
    %c0_i32_1 = arith.constant 0 : i32
    return %c0_i32, %c0_i32_0 : i32, i32
  }
  func.func @transform_2(%arg0: i32) -> (i32, i32) {
    %c0_i32 = arith.constant 0 : i32
    %c0_i32_0 = arith.constant 0 : i32
    %c0_i32_1 = arith.constant 0 : i32
    return %c0_i32, %c0_i32_0 : i32, i32
  }
  func.func @transform_3(%arg0: i32) -> (i32, i32) {
    %c0_i32 = arith.constant 0 : i32
    %c0_i32_0 = arith.constant 0 : i32
    return %c0_i32, %arg0 : i32, i32
  }
}

</mosaic_0001>

<llo_original>
// kernel: mlp_forward.1
$region0: #{mlp_forward.1}
  #allocation0 [shape = 'u32[]', space=smem, size = 0x4, offset = 0x4, fixed_abs, tag = 'smem constant byte address 0x4 - core index']
  #allocation1 [shape = 'u32[144,128]{1,0:T(1,128)}', space=vmem, size = 0x12000, scoped, tag = 'internal scratch']
  %s0 = inlined_call_operand.vmem [shape: bf16[1024,16], index: 0, kind: input, shape index: {}]
  %s1 = inlined_call_operand.vmem [shape: bf16[128,64], index: 1, kind: input, shape index: {}]
  %s2 = inlined_call_operand.vmem [shape: f32[152,1], index: 2, kind: input, shape index: {}]
  %s3 = inlined_call_operand.vmem [shape: f32[1,1024], index: 3, kind: output, shape index: {}]
  %s4 = sld [smem:[#allocation0]]
  $region45: #{mlp_forward.1} parent=0
    _
  %s6 = ssub.s32 1, %s4
  %s7 = scalar_select 0, %s6, %s4
  loop: start=0, step=1, limit=4
  $region2: #{mlp_forward.1} parent=0 // loop_pre_header
    _
  $region3: #{mlp_forward.1} parent=0 // loop_header
    %s9 = sphi 0, %s13
    %p10 = scmp.ge.s32.totalorder %s9, 4
    %s19 = sphi 0, %s21
    %s22 = sphi 0, %s19
    %s23 = sphi 0, %s22
    %s39 = sphi 0, %s23
    %s43 = sphi 0, %s43
    %s45 = sphi 0, %s43
    %s46 = sphi 0, %s45
    %s60 = sphi 0, %s46
    %s64 = sphi 0, %s64
    %s66 = sphi 0, %s64
    %s67 = sphi 0, %s66
    %s81 = sphi 0, %s67
    %s87 = sphi 0, %s89
    %s90 = sphi 0, %s87
    %s91 = sphi 0, %s90
    %s107 = sphi 0, %s91
  $region4: #{mlp_forward.1} parent=0 // loop_header_branch
    %12 = sbr.rel (%p10) target = $region8
  $region5: #{mlp_forward.1} parent=0 // loop_body
    %s14 = ssub.s32 %s9, 1
    %s15 = ssub.s32 %s9, 2
    %s16 = sadd.s32 %s9, 1
    %s17 = ssub.s32 %s9, %s16
    %p18 = scmp.eq.s32.totalorder %s17, 0
    %s20 = sadd.s32 %s19, 1
    %s21 = scalar_select %p18, %s19, %s20
    %p24 = pneg %p18
    %p25 = scmp.eq.s32.totalorder %s9, 1
    %p26 = por %p24, %p25
    %p27 = scmp.ne.s32.totalorder %s19, %s22
    %p28 = scmp.eq.s32.totalorder %s9, 0
    %p29 = por %p27, %p28
    %p30 = scmp.ne.s32.totalorder %s19, %s22
    %p31 = scmp.eq.s32.totalorder %s14, 1
    %p32 = por %p30, %p31
    %p33 = scmp.ne.s32.totalorder %s22, %s23
    %p34 = scmp.eq.s32.totalorder %s14, 0
    %p35 = por %p33, %p34
    %p36 = scmp.ne.s32.totalorder %s22, %s23
    %p37 = scmp.eq.s32.totalorder %s15, 1
    %p38 = por %p36, %p37
    %p40 = scmp.ne.s32.totalorder %s23, %s39
    %p41 = scmp.eq.s32.totalorder %s15, 0
    %p42 = por %p40, %p41
    %s44 = sadd.s32 %s43, 1
    %p47 = scmp.eq.s32.totalorder %s9, 1
    %p48 = scmp.ne.s32.totalorder %s43, %s45
    %p49 = scmp.eq.s32.totalorder %s9, 0
    %p50 = por %p48, %p49
    %p51 = scmp.ne.s32.totalorder %s43, %s45
    %p52 = scmp.eq.s32.totalorder %s14, 1
    %p53 = por %p51, %p52
    %p54 = scmp.ne.s32.totalorder %s45, %s46
    %p55 = scmp.eq.s32.totalorder %s14, 0
    %p56 = por %p54, %p55
    %p57 = scmp.ne.s32.totalorder %s45, %s46
    %p58 = scmp.eq.s32.totalorder %s15, 1
    %p59 = por %p57, %p58
    %p61 = scmp.ne.s32.totalorder %s46, %s60
    %p62 = scmp.eq.s32.totalorder %s15, 0
    %p63 = por %p61, %p62
    %s65 = sadd.s32 %s64, 1
    %p68 = scmp.eq.s32.totalorder %s9, 1
    %p69 = scmp.ne.s32.totalorder %s64, %s66
    %p70 = scmp.eq.s32.totalorder %s9, 0
    %p71 = por %p69, %p70
    %p72 = scmp.ne.s32.totalorder %s64, %s66
    %p73 = scmp.eq.s32.totalorder %s14, 1
    %p74 = por %p72, %p73
    %p75 = scmp.ne.s32.totalorder %s66, %s67
    %p76 = scmp.eq.s32.totalorder %s14, 0
    %p77 = por %p75, %p76
    %p78 = scmp.ne.s32.totalorder %s66, %s67
    %p79 = scmp.eq.s32.totalorder %s15, 1
    %p80 = por %p78, %p79
    %p82 = scmp.ne.s32.totalorder %s67, %s81
    %p83 = scmp.eq.s32.totalorder %s15, 0
    %p84 = por %p82, %p83
    %s85 = ssub.s32 %s9, %s16
    %p86 = scmp.eq.s32.totalorder %s85, 0
    %s88 = sadd.s32 %s87, 1
    %s89 = scalar_select %p86, %s87, %s88
    %p92 = pneg %p86
    %p93 = scmp.eq.s32.totalorder %s9, 1
    %p94 = por %p92, %p93
    %p95 = scmp.ne.s32.totalorder %s87, %s90
    %p96 = scmp.eq.s32.totalorder %s9, 0
    %p97 = por %p95, %p96
    %p98 = scmp.ne.s32.totalorder %s87, %s90
    %p99 = scmp.eq.s32.totalorder %s14, 1
    %p100 = por %p98, %p99
    %p101 = scmp.ne.s32.totalorder %s90, %s91
    %p102 = scmp.eq.s32.totalorder %s14, 0
    %p103 = por %p101, %p102
    %p104 = scmp.ne.s32.totalorder %s90, %s91
    %p105 = scmp.eq.s32.totalorder %s15, 1
    %p106 = por %p104, %p105
    %p108 = scmp.ne.s32.totalorder %s91, %s107
    %p109 = scmp.eq.s32.totalorder %s15, 0
    %p110 = por %p108, %p109
    %p111 = scmp.le.s32.totalorder 1, %s9
    %p112 = scmp.lt.s32.totalorder %s9, 3
    %p113 = pnand %p111, %p112
    %p114 = pneg %p113
    // Predicated region
    $region9: #{mlp_forward.1} parent=5 // pred_check
      _
    $region10: #{mlp_forward.1} parent=5 // pred_check_branch
      %116 = sbr.rel (%p113) target = $region12
    $region11: #{mlp_forward.1} parent=5 // pred_region
      %s117 = ssub.s32 %s9, 1
      // Predicated region
      $region13: #{mlp_forward.1} parent=11 // pred_check
        %p118 = pneg %p56
      $region14: #{mlp_forward.1} parent=11 // pred_check_branch
        %120 = sbr.rel (%p118) target = $region16
      $region15: #{mlp_forward.1} parent=11 // pred_region
        _
      $region16: #{mlp_forward.1} parent=11 // pred_fallthru
        _
      // Predicated region
      $region17: #{mlp_forward.1} parent=11 // pred_check
        %p121 = pneg %p77
      $region18: #{mlp_forward.1} parent=11 // pred_check_branch
        %123 = sbr.rel (%p121) target = $region20
      $region19: #{mlp_forward.1} parent=11 // pred_region
        _
      $region20: #{mlp_forward.1} parent=11 // pred_fallthru
        _
    $region12: #{mlp_forward.1} parent=5 // pred_fallthru
      _
    %p124 = scmp.lt.s32.totalorder %s9, 2
    // Predicated region
    $region21: #{mlp_forward.1} parent=5 // pred_check
      %p125 = pneg %p124
    $region22: #{mlp_forward.1} parent=5 // pred_check_branch
      %127 = sbr.rel (%p125) target = $region24
    $region23: #{mlp_forward.1} parent=5 // pred_region
      // Predicated region
      $region25: #{mlp_forward.1} parent=23 // pred_check
        %p128 = pneg %p29
      $region26: #{mlp_forward.1} parent=23 // pred_check_branch
        %130 = sbr.rel (%p128) target = $region28
      $region27: #{mlp_forward.1} parent=23 // pred_region
        %s131 = smul.u32 64, %s9
        %p132 = scmp.lt.s32.totalorder %s131, 127
        %s133 = scalar_select %p132, %s131, 127
        %s134 = smul.addr %s133, 4
        %s135 = scalar_lea.vmem %s0, %s134
        %s136 = smul.u32 64, %s9
      $region28: #{mlp_forward.1} parent=23 // pred_fallthru
        _
    $region24: #{mlp_forward.1} parent=5 // pred_fallthru
      _
    %p137 = scmp.le.s32.totalorder 1, %s9
    %p138 = scmp.lt.s32.totalorder %s9, 3
    %p139 = pnand %p137, %p138
    %p140 = pneg %p139
    // Predicated region
    $region29: #{mlp_forward.1} parent=5 // pred_check
      _
    $region30: #{mlp_forward.1} parent=5 // pred_check_branch
      %142 = sbr.rel (%p139) target = $region32
    $region31: #{mlp_forward.1} parent=5 // pred_region
      %s143 = ssub.s32 %s9, 1
      %s144 = smul.u32 64, %s14
      %p145 = scmp.lt.s32.totalorder %s144, 127
      %s146 = scalar_select %p145, %s144, 127
      %s147 = smul.addr %s146, 4
      %s148 = scalar_lea.vmem %s0, %s147
      %p149 = pneg %p35
      %p150 = pneg %p32
      %p151 = pneg %p56
      %p152 = pneg %p53
      %p153 = pneg %p77
      %p154 = pneg %p74
      %p155 = pneg %p103
      %p156 = pneg %p100
      %s157 = smul.u32 4, %s14
      %p158 = scmp.lt.s32.totalorder %s157, 7
      %s159 = scalar_select %p158, %s157, 7
      %s160 = scalar_lea.vmem %s3, %s159
      %s161 = smul.u32 64, %s14
      %p162 = scmp.lt.s32.totalorder %s161, 127
      %s163 = scalar_select %p162, %s161, 127
      %s164 = smul.addr %s163, 4
      %s165 = scalar_lea.vmem %s0, %s164
      %s166 = smul.u32 64, %s14
      %s167 = smul.u32 4, %s14
      %p168 = scmp.lt.s32.totalorder %s167, 7
      %s169 = scalar_select %p168, %s167, 7
      %s170 = scalar_lea.vmem %s3, %s169
      %s171 = smul.u32 4, %s14
      %v173 = vld [vmem:[%s165] sm:$0xf]
      %v174 = vld [vmem:[%s165 + $0x4] sm:$0xf]
      %v175 = vld [vmem:[%s165 + $0x8] sm:$0xf]
      %v176 = vld [vmem:[%s165 + $0xc] sm:$0xf]
      %v177 = vld [vmem:[%s165 + $0x10] sm:$0xf]
      %v178 = vld [vmem:[%s165 + $0x14] sm:$0xf]
      %v179 = vld [vmem:[%s165 + $0x18] sm:$0xf]
      %v180 = vld [vmem:[%s165 + $0x1c] sm:$0xf]
      %v181 = vld [vmem:[%s165 + $0x20] sm:$0xf]
      %v182 = vld [vmem:[%s165 + $0x24] sm:$0xf]
      %v183 = vld [vmem:[%s165 + $0x28] sm:$0xf]
      %v184 = vld [vmem:[%s165 + $0x2c] sm:$0xf]
      %v185 = vld [vmem:[%s165 + $0x30] sm:$0xf]
      %v186 = vld [vmem:[%s165 + $0x34] sm:$0xf]
      %v187 = vld [vmem:[%s165 + $0x38] sm:$0xf]
      %v188 = vld [vmem:[%s165 + $0x3c] sm:$0xf]
      %v189 = vld [vmem:[%s165 + $0x40] sm:$0xf]
      %v190 = vld [vmem:[%s165 + $0x44] sm:$0xf]
      %v191 = vld [vmem:[%s165 + $0x48] sm:$0xf]
      %v192 = vld [vmem:[%s165 + $0x4c] sm:$0xf]
      %v193 = vld [vmem:[%s165 + $0x50] sm:$0xf]
      %v194 = vld [vmem:[%s165 + $0x54] sm:$0xf]
      %v195 = vld [vmem:[%s165 + $0x58] sm:$0xf]
      %v196 = vld [vmem:[%s165 + $0x5c] sm:$0xf]
      %v197 = vld [vmem:[%s165 + $0x60] sm:$0xf]
      %v198 = vld [vmem:[%s165 + $0x64] sm:$0xf]
      %v199 = vld [vmem:[%s165 + $0x68] sm:$0xf]
      %v200 = vld [vmem:[%s165 + $0x6c] sm:$0xf]
      %v201 = vld [vmem:[%s165 + $0x70] sm:$0xf]
      %v202 = vld [vmem:[%s165 + $0x74] sm:$0xf]
      %v203 = vld [vmem:[%s165 + $0x78] sm:$0xf]
      %v204 = vld [vmem:[%s165 + $0x7c] sm:$0xf]
      %v205 = vld [vmem:[%s165 + $0x80] sm:$0xf]
      %v206 = vld [vmem:[%s165 + $0x84] sm:$0xf]
      %v207 = vld [vmem:[%s165 + $0x88] sm:$0xf]
      %v208 = vld [vmem:[%s165 + $0x8c] sm:$0xf]
      %v209 = vld [vmem:[%s165 + $0x90] sm:$0xf]
      %v210 = vld [vmem:[%s165 + $0x94] sm:$0xf]
      %v211 = vld [vmem:[%s165 + $0x98] sm:$0xf]
      %v212 = vld [vmem:[%s165 + $0x9c] sm:$0xf]
      %v213 = vld [vmem:[%s165 + $0xa0] sm:$0xf]
      %v214 = vld [vmem:[%s165 + $0xa4] sm:$0xf]
      %v215 = vld [vmem:[%s165 + $0xa8] sm:$0xf]
      %v216 = vld [vmem:[%s165 + $0xac] sm:$0xf]
      %v217 = vld [vmem:[%s165 + $0xb0] sm:$0xf]
      %v218 = vld [vmem:[%s165 + $0xb4] sm:$0xf]
      %v219 = vld [vmem:[%s165 + $0xb8] sm:$0xf]
      %v220 = vld [vmem:[%s165 + $0xbc] sm:$0xf]
      %v221 = vld [vmem:[%s165 + $0xc0] sm:$0xf]
      %v222 = vld [vmem:[%s165 + $0xc4] sm:$0xf]
      %v223 = vld [vmem:[%s165 + $0xc8] sm:$0xf]
      %v224 = vld [vmem:[%s165 + $0xcc] sm:$0xf]
      %v225 = vld [vmem:[%s165 + $0xd0] sm:$0xf]
      %v226 = vld [vmem:[%s165 + $0xd4] sm:$0xf]
      %v227 = vld [vmem:[%s165 + $0xd8] sm:$0xf]
      %v228 = vld [vmem:[%s165 + $0xdc] sm:$0xf]
      %v229 = vld [vmem:[%s165 + $0xe0] sm:$0xf]
      %v230 = vld [vmem:[%s165 + $0xe4] sm:$0xf]
      %v231 = vld [vmem:[%s165 + $0xe8] sm:$0xf]
      %v232 = vld [vmem:[%s165 + $0xec] sm:$0xf]
      %v233 = vld [vmem:[%s165 + $0xf0] sm:$0xf]
      %v234 = vld [vmem:[%s165 + $0xf4] sm:$0xf]
      %v235 = vld [vmem:[%s165 + $0xf8] sm:$0xf]
      %v236 = vld [vmem:[%s165 + $0xfc] sm:$0xf]
      %v237 = vld [vmem:[%s1] sm:$0xf]
      %v238 = vld [vmem:[%s1 + $0x4] sm:$0xf]
      %v239 = vld [vmem:[%s1 + $0x8] sm:$0xf]
      %v240 = vld [vmem:[%s1 + $0xc] sm:$0xf]
      %v241 = vld [vmem:[%s1 + $0x10] sm:$0xf]
      %v242 = vld [vmem:[%s1 + $0x14] sm:$0xf]
      %v243 = vld [vmem:[%s1 + $0x18] sm:$0xf]
      %v244 = vld [vmem:[%s1 + $0x1c] sm:$0xf]
      %v245 = vld [vmem:[%s2] sm:$0xff]
      %v246 = vld [vmem:[%s2 + $0x8] sm:$0xff]
      %v247 = vld [vmem:[%s2 + $0x10] sm:$0xff]
      %v248 = vld [vmem:[%s2 + $0x18] sm:$0xff]
      %v249 = vld [vmem:[%s2 + $0x20] sm:$0xff]
      %v250 = vld [vmem:[%s2 + $0x28] sm:$0xff]
      %v251 = vld [vmem:[%s2 + $0x30] sm:$0xff]
      %v252 = vld [vmem:[%s2 + $0x38] sm:$0xff]
      %254 = vset.pattern.permute.xlu0 0
      %255 = vperm.xlu0 %254, %v245
      %v256 = vpop.permute.xlu0 %255
      %259 = vset.pattern.permute.xlu0 0
      %260 = vperm.xlu0 %259, %v246
      %v261 = vpop.permute.xlu0 %260
      %264 = vset.pattern.permute.xlu0 0
      %265 = vperm.xlu0 %264, %v247
      %v266 = vpop.permute.xlu0 %265
      %269 = vset.pattern.permute.xlu0 0
      %270 = vperm.xlu0 %269, %v248
      %v271 = vpop.permute.xlu0 %270
      %274 = vset.pattern.permute.xlu0 0
      %275 = vperm.xlu0 %274, %v249
      %v276 = vpop.permute.xlu0 %275
      %279 = vset.pattern.permute.xlu0 0
      %280 = vperm.xlu0 %279, %v250
      %v281 = vpop.permute.xlu0 %280
      %284 = vset.pattern.permute.xlu0 0
      %285 = vperm.xlu0 %284, %v251
      %v286 = vpop.permute.xlu0 %285
      %289 = vset.pattern.permute.xlu0 0
      %290 = vperm.xlu0 %289, %v252
      %v291 = vpop.permute.xlu0 %290
      %v301 = vunpack.c.l.b16 %v237
      %v302 = vunpack.c.l.b16 %v238
      %v303 = vunpack.c.l.b16 %v239
      %v304 = vunpack.c.l.b16 %v240
      %v305 = vunpack.c.l.b16 %v241
      %v306 = vunpack.c.l.b16 %v242
      %v307 = vunpack.c.l.b16 %v243
      %v308 = vunpack.c.l.b16 %v244
      %v309 = vpack.c.b16 %v302, %v301
      %v310 = vpack.c.b16 %v304, %v303
      %v311 = vpack.c.b16 %v306, %v305
      %v312 = vpack.c.b16 %v308, %v307
      %v377 = vunpack.c.l.b16 %v173
      %v378 = vunpack.c.l.b16 %v174
      %v379 = vunpack.c.l.b16 %v175
      %v380 = vunpack.c.l.b16 %v176
      %v381 = vunpack.c.l.b16 %v177
      %v382 = vunpack.c.l.b16 %v178
      %v383 = vunpack.c.l.b16 %v179
      %v384 = vunpack.c.l.b16 %v180
      %v385 = vunpack.c.l.b16 %v181
      %v386 = vunpack.c.l.b16 %v182
      %v387 = vunpack.c.l.b16 %v183
      %v388 = vunpack.c.l.b16 %v184
      %v389 = vunpack.c.l.b16 %v185
      %v390 = vunpack.c.l.b16 %v186
      %v391 = vunpack.c.l.b16 %v187
      %v392 = vunpack.c.l.b16 %v188
      %v393 = vunpack.c.l.b16 %v189
      %v394 = vunpack.c.l.b16 %v190
      %v395 = vunpack.c.l.b16 %v191
      %v396 = vunpack.c.l.b16 %v192
      %v397 = vunpack.c.l.b16 %v193
      %v398 = vunpack.c.l.b16 %v194
      %v399 = vunpack.c.l.b16 %v195
      %v400 = vunpack.c.l.b16 %v196
      %v401 = vunpack.c.l.b16 %v197
      %v402 = vunpack.c.l.b16 %v198
      %v403 = vunpack.c.l.b16 %v199
      %v404 = vunpack.c.l.b16 %v200
      %v405 = vunpack.c.l.b16 %v201
      %v406 = vunpack.c.l.b16 %v202
      %v407 = vunpack.c.l.b16 %v203
      %v408 = vunpack.c.l.b16 %v204
      %v409 = vunpack.c.l.b16 %v205
      %v410 = vunpack.c.l.b16 %v206
      %v411 = vunpack.c.l.b16 %v207
      %v412 = vunpack.c.l.b16 %v208
      %v413 = vunpack.c.l.b16 %v209
      %v414 = vunpack.c.l.b16 %v210
      %v415 = vunpack.c.l.b16 %v211
      %v416 = vunpack.c.l.b16 %v212
      %v417 = vunpack.c.l.b16 %v213
      %v418 = vunpack.c.l.b16 %v214
      %v419 = vunpack.c.l.b16 %v215
      %v420 = vunpack.c.l.b16 %v216
      %v421 = vunpack.c.l.b16 %v217
      %v422 = vunpack.c.l.b16 %v218
      %v423 = vunpack.c.l.b16 %v219
      %v424 = vunpack.c.l.b16 %v220
      %v425 = vunpack.c.l.b16 %v221
      %v426 = vunpack.c.l.b16 %v222
      %v427 = vunpack.c.l.b16 %v223
      %v428 = vunpack.c.l.b16 %v224
      %v429 = vunpack.c.l.b16 %v225
      %v430 = vunpack.c.l.b16 %v226
      %v431 = vunpack.c.l.b16 %v227
      %v432 = vunpack.c.l.b16 %v228
      %v433 = vunpack.c.l.b16 %v229
      %v434 = vunpack.c.l.b16 %v230
      %v435 = vunpack.c.l.b16 %v231
      %v436 = vunpack.c.l.b16 %v232
      %v437 = vunpack.c.l.b16 %v233
      %v438 = vunpack.c.l.b16 %v234
      %v439 = vunpack.c.l.b16 %v235
      %v440 = vunpack.c.l.b16 %v236
      %v441 = vpack.c.b16 %v378, %v377
      %v442 = vpack.c.b16 %v380, %v379
      %v443 = vpack.c.b16 %v382, %v381
      %v444 = vpack.c.b16 %v384, %v383
      %v445 = vpack.c.b16 %v386, %v385
      %v446 = vpack.c.b16 %v388, %v387
      %v447 = vpack.c.b16 %v390, %v389
      %v448 = vpack.c.b16 %v392, %v391
      %v449 = vpack.c.b16 %v394, %v393
      %v450 = vpack.c.b16 %v396, %v395
      %v451 = vpack.c.b16 %v398, %v397
      %v452 = vpack.c.b16 %v400, %v399
      %v453 = vpack.c.b16 %v402, %v401
      %v454 = vpack.c.b16 %v404, %v403
      %v455 = vpack.c.b16 %v406, %v405
      %v456 = vpack.c.b16 %v408, %v407
      %v457 = vpack.c.b16 %v410, %v409
      %v458 = vpack.c.b16 %v412, %v411
      %v459 = vpack.c.b16 %v414, %v413
      %v460 = vpack.c.b16 %v416, %v415
      %v461 = vpack.c.b16 %v418, %v417
      %v462 = vpack.c.b16 %v420, %v419
      %v463 = vpack.c.b16 %v422, %v421
      %v464 = vpack.c.b16 %v424, %v423
      %v465 = vpack.c.b16 %v426, %v425
      %v466 = vpack.c.b16 %v428, %v427
      %v467 = vpack.c.b16 %v430, %v429
      %v468 = vpack.c.b16 %v432, %v431
      %v469 = vpack.c.b16 %v434, %v433
      %v470 = vpack.c.b16 %v436, %v435
      %v471 = vpack.c.b16 %v438, %v437
      %v472 = vpack.c.b16 %v440, %v439
      %vm473 = vcmask 130048
      %v475 = vsel %vm473, %v309, 0
      %v478 = vsel %vm473, %v310, 0
      %v481 = vsel %vm473, %v311, 0
      %v484 = vsel %vm473, %v312, 0
      %v487 = vsel %vm473, %v441, 0
      %v490 = vsel %vm473, %v442, 0
      %v493 = vsel %vm473, %v443, 0
      %v496 = vsel %vm473, %v444, 0
      %v499 = vsel %vm473, %v445, 0
      %v502 = vsel %vm473, %v446, 0
      %v505 = vsel %vm473, %v447, 0
      %v508 = vsel %vm473, %v448, 0
      %v511 = vsel %vm473, %v449, 0
      %v514 = vsel %vm473, %v450, 0
      %v517 = vsel %vm473, %v451, 0
      %v520 = vsel %vm473, %v452, 0
      %v523 = vsel %vm473, %v453, 0
      %v526 = vsel %vm473, %v454, 0
      %v529 = vsel %vm473, %v455, 0
      %v532 = vsel %vm473, %v456, 0
      %v535 = vsel %vm473, %v457, 0
      %v538 = vsel %vm473, %v458, 0
      %v541 = vsel %vm473, %v459, 0
      %v544 = vsel %vm473, %v460, 0
      %v547 = vsel %vm473, %v461, 0
      %v550 = vsel %vm473, %v462, 0
      %v553 = vsel %vm473, %v463, 0
      %v556 = vsel %vm473, %v464, 0
      %v559 = vsel %vm473, %v465, 0
      %v562 = vsel %vm473, %v466, 0
      %v565 = vsel %vm473, %v467, 0
      %v568 = vsel %vm473, %v468, 0
      %v571 = vsel %vm473, %v469, 0
      %v574 = vsel %vm473, %v470, 0
      %v577 = vsel %vm473, %v471, 0
      %v580 = vsel %vm473, %v472, 0
      %582 = vmatprep.subr.bf16.mxu0 0
      %583 = vmatpush1.bf16.xpose.msra.mxu0 %v487
      %584 = vmatprep.subr.bf16.mxu0 0
      %585 = vmatpush1.bf16.xpose.msra.mxu0 %v490
      %586 = vmatprep.subr.bf16.mxu0 0
      %587 = vmatpush1.bf16.xpose.msra.mxu0 %v493
      %588 = vmatprep.subr.bf16.mxu0 0
      %589 = vmatpush1.bf16.xpose.msra.mxu0 %v496
      %590 = vmatprep.subr.bf16.mxu0 0
      %591 = vmatpush1.bf16.xpose.msra.mxu0 %v499
      %592 = vmatprep.subr.bf16.mxu0 0
      %593 = vmatpush1.bf16.xpose.msra.mxu0 %v502
      %594 = vmatprep.subr.bf16.mxu0 0
      %595 = vmatpush1.bf16.xpose.msra.mxu0 %v505
      %596 = vmatprep.subr.bf16.mxu0 0
      %597 = vmatpush1.bf16.xpose.msra.mxu0 %v508
      %598 = vmatprep.subr.bf16.mxu0 0
      %599 = vmatpush1.bf16.xpose.msra.mxu0 %v511
      %600 = vmatprep.subr.bf16.mxu0 0
      %601 = vmatpush1.bf16.xpose.msra.mxu0 %v514
      %602 = vmatprep.subr.bf16.mxu0 0
      %603 = vmatpush1.bf16.xpose.msra.mxu0 %v517
      %604 = vmatprep.subr.bf16.mxu0 0
      %605 = vmatpush1.bf16.xpose.msra.mxu0 %v520
      %606 = vmatprep.subr.bf16.mxu0 0
      %607 = vmatpush1.bf16.xpose.msra.mxu0 %v523
      %608 = vmatprep.subr.bf16.mxu0 0
      %609 = vmatpush1.bf16.xpose.msra.mxu0 %v526
      %610 = vmatprep.subr.bf16.mxu0 0
      %611 = vmatpush1.bf16.xpose.msra.mxu0 %v529
      %612 = vmatprep.subr.bf16.mxu0 0
      %613 = vmatpush1.bf16.xpose.msra.mxu0 %v532
      %614 = vmatprep.mubr.bf16.mxu0 0
      %615 = vmatmul.mubr.bf16.gmra.mrb[0].mxu0 %v475
      %v616 = vpop.f32.mrb[0].mxu0
      %v617 = vadd.f32 %v256, %v616
      %v618 = vpop.f32.mrb[0].mxu0
      %v619 = vadd.f32 %v256, %v618
      %v620 = vpop.f32.mrb[0].mxu0
      %v621 = vadd.f32 %v261, %v620
      %v622 = vpop.f32.mrb[0].mxu0
      %v623 = vadd.f32 %v261, %v622
      %624 = vmatprep.mubr.bf16.mxu0 0
      %625 = vmatmul.mubr.bf16.gmra.mrb[0].mxu0 %v478
      %v626 = vpop.f32.mrb[0].mxu0
      %v627 = vadd.f32 %v266, %v626
      %v628 = vpop.f32.mrb[0].mxu0
      %v629 = vadd.f32 %v266, %v628
      %v630 = vpop.f32.mrb[0].mxu0
      %v631 = vadd.f32 %v271, %v630
      %v632 = vpop.f32.mrb[0].mxu0
      %v633 = vadd.f32 %v271, %v632
      %634 = vmatprep.mubr.bf16.mxu0 0
      %635 = vmatmul.mubr.bf16.gmra.mrb[0].mxu0 %v481
      %v636 = vpop.f32.mrb[0].mxu0
      %v637 = vadd.f32 %v276, %v636
      %v638 = vpop.f32.mrb[0].mxu0
      %v639 = vadd.f32 %v276, %v638
      %v640 = vpop.f32.mrb[0].mxu0
      %v641 = vadd.f32 %v281, %v640
      %v642 = vpop.f32.mrb[0].mxu0
      %v643 = vadd.f32 %v281, %v642
      %644 = vmatprep.mubr.bf16.mxu0 0
      %645 = vmatmul.mubr.bf16.gmra.mrb[0].mxu0 %v484
      %v646 = vpop.f32.mrb[0].mxu0
      %v647 = vadd.f32 %v286, %v646
      %v648 = vpop.f32.mrb[0].mxu0
      %v649 = vadd.f32 %v286, %v648
      %v650 = vpop.f32.mrb[0].mxu0
      %v651 = vadd.f32 %v291, %v650
      %v652 = vpop.f32.mrb[0].mxu0
      %v653 = vadd.f32 %v291, %v652
      %654 = vdwg.mxu0
      %655 = vmatprep.subr.bf16.mxu0 0
      %656 = vmatpush1.bf16.xpose.msra.mxu0 %v535
      %657 = vmatprep.subr.bf16.mxu0 0
      %658 = vmatpush1.bf16.xpose.msra.mxu0 %v538
      %659 = vmatprep.subr.bf16.mxu0 0
      %660 = vmatpush1.bf16.xpose.msra.mxu0 %v541
      %661 = vmatprep.subr.bf16.mxu0 0
      %662 = vmatpush1.bf16.xpose.msra.mxu0 %v544
      %663 = vmatprep.subr.bf16.mxu0 0
      %664 = vmatpush1.bf16.xpose.msra.mxu0 %v547
      %665 = vmatprep.subr.bf16.mxu0 0
      %666 = vmatpush1.bf16.xpose.msra.mxu0 %v550
      %667 = vmatprep.subr.bf16.mxu0 0
      %668 = vmatpush1.bf16.xpose.msra.mxu0 %v553
      %669 = vmatprep.subr.bf16.mxu0 0
      %670 = vmatpush1.bf16.xpose.msra.mxu0 %v556
      %671 = vmatprep.subr.bf16.mxu0 0
      %672 = vmatpush1.bf16.xpose.msra.mxu0 %v559
      %673 = vmatprep.subr.bf16.mxu0 0
      %674 = vmatpush1.bf16.xpose.msra.mxu0 %v562
      %675 = vmatprep.subr.bf16.mxu0 0
      %676 = vmatpush1.bf16.xpose.msra.mxu0 %v565
      %677 = vmatprep.subr.bf16.mxu0 0
      %678 = vmatpush1.bf16.xpose.msra.mxu0 %v568
      %679 = vmatprep.subr.bf16.mxu0 0
      %680 = vmatpush1.bf16.xpose.msra.mxu0 %v571
      %681 = vmatprep.subr.bf16.mxu0 0
      %682 = vmatpush1.bf16.xpose.msra.mxu0 %v574
      %683 = vmatprep.subr.bf16.mxu0 0
      %684 = vmatpush1.bf16.xpose.msra.mxu0 %v577
      %685 = vmatprep.subr.bf16.mxu0 0
      %686 = vmatpush1.bf16.xpose.msra.mxu0 %v580
      %687 = vmatprep.mubr.bf16.mxu0 0
      %688 = vmatmul.mubr.bf16.gmra.mrb[0].mxu0 %v475
      %v689 = vpop.f32.mrb[0].mxu0
      %v690 = vadd.f32 %v256, %v689
      %v691 = vpop.f32.mrb[0].mxu0
      %v692 = vadd.f32 %v256, %v691
      %v693 = vpop.f32.mrb[0].mxu0
      %v694 = vadd.f32 %v261, %v693
      %v695 = vpop.f32.mrb[0].mxu0
      %v696 = vadd.f32 %v261, %v695
      %697 = vmatprep.mubr.bf16.mxu0 0
      %698 = vmatmul.mubr.bf16.gmra.mrb[0].mxu0 %v478
      %v699 = vpop.f32.mrb[0].mxu0
      %v700 = vadd.f32 %v266, %v699
      %v701 = vpop.f32.mrb[0].mxu0
      %v702 = vadd.f32 %v266, %v701
      %v703 = vpop.f32.mrb[0].mxu0
      %v704 = vadd.f32 %v271, %v703
      %v705 = vpop.f32.mrb[0].mxu0
      %v706 = vadd.f32 %v271, %v705
      %707 = vmatprep.mubr.bf16.mxu0 0
      %708 = vmatmul.mubr.bf16.gmra.mrb[0].mxu0 %v481
      %v709 = vpop.f32.mrb[0].mxu0
      %v710 = vadd.f32 %v276, %v709
      %v711 = vpop.f32.mrb[0].mxu0
      %v712 = vadd.f32 %v276, %v711
      %v713 = vpop.f32.mrb[0].mxu0
      %v714 = vadd.f32 %v281, %v713
      %v715 = vpop.f32.mrb[0].mxu0
      %v716 = vadd.f32 %v281, %v715
      %717 = vmatprep.mubr.bf16.mxu0 0
      %718 = vmatmul.mubr.bf16.gmra.mrb[0].mxu0 %v484
      %v719 = vpop.f32.mrb[0].mxu0
      %v720 = vadd.f32 %v286, %v719
      %v721 = vpop.f32.mrb[0].mxu0
      %v722 = vadd.f32 %v286, %v721
      %v723 = vpop.f32.mrb[0].mxu0
      %v724 = vadd.f32 %v291, %v723
      %v725 = vpop.f32.mrb[0].mxu0
      %v726 = vadd.f32 %v291, %v725
      %727 = vdwg.mxu0
      %v728 = vmax.f32 %v617, 0.0
      %v729 = vmax.f32 %v619, 0.0
      %v730 = vmax.f32 %v690, 0.0
      %v731 = vmax.f32 %v692, 0.0
      %v732 = vmax.f32 %v621, 0.0
      %v733 = vmax.f32 %v623, 0.0
      %v734 = vmax.f32 %v694, 0.0
      %v735 = vmax.f32 %v696, 0.0
      %v736 = vmax.f32 %v627, 0.0
      %v737 = vmax.f32 %v629, 0.0
      %v738 = vmax.f32 %v700, 0.0
      %v739 = vmax.f32 %v702, 0.0
      %v740 = vmax.f32 %v631, 0.0
      %v741 = vmax.f32 %v633, 0.0
      %v742 = vmax.f32 %v704, 0.0
      %v743 = vmax.f32 %v706, 0.0
      %v744 = vmax.f32 %v637, 0.0
      %v745 = vmax.f32 %v639, 0.0
      %v746 = vmax.f32 %v710, 0.0
      %v747 = vmax.f32 %v712, 0.0
      %v748 = vmax.f32 %v641, 0.0
      %v749 = vmax.f32 %v643, 0.0
      %v750 = vmax.f32 %v714, 0.0
      %v751 = vmax.f32 %v716, 0.0
      %v752 = vmax.f32 %v647, 0.0
      %v753 = vmax.f32 %v649, 0.0
      %v754 = vmax.f32 %v720, 0.0
      %v755 = vmax.f32 %v722, 0.0
      %v756 = vmax.f32 %v651, 0.0
      %v757 = vmax.f32 %v653, 0.0
      %v758 = vmax.f32 %v724, 0.0
      %v759 = vmax.f32 %v726, 0.0
      %v760 = vpack.c.bf16 %v732, %v728
      %v761 = vpack.c.bf16 %v733, %v729
      %v762 = vpack.c.bf16 %v734, %v730
      %v763 = vpack.c.bf16 %v735, %v731
      %v764 = vpack.c.bf16 %v740, %v736
      %v765 = vpack.c.bf16 %v741, %v737
      %v766 = vpack.c.bf16 %v742, %v738
      %v767 = vpack.c.bf16 %v743, %v739
      %v768 = vpack.c.bf16 %v748, %v744
      %v769 = vpack.c.bf16 %v749, %v745
      %v770 = vpack.c.bf16 %v750, %v746
      %v771 = vpack.c.bf16 %v751, %v747
      %v772 = vpack.c.bf16 %v756, %v752
      %v773 = vpack.c.bf16 %v757, %v753
      %v774 = vpack.c.bf16 %v758, %v754
      %v775 = vpack.c.bf16 %v759, %v755
      %v776 = vld [vmem:[%s1 + $0x20] sm:$0xf]
      %v777 = vld [vmem:[%s1 + $0x24] sm:$0xf]
      %v778 = vld [vmem:[%s1 + $0x28] sm:$0xf]
      %v779 = vld [vmem:[%s1 + $0x2c] sm:$0xf]
      %v780 = vld [vmem:[%s2 + $0x40] sm:$0xff]
      %v781 = vld [vmem:[%s2 + $0x48] sm:$0xff]
      %v782 = vld [vmem:[%s2 + $0x50] sm:$0xff]
      %v783 = vld [vmem:[%s2 + $0x58] sm:$0xff]
      %785 = vset.pattern.permute.xlu0 0
      %786 = vperm.xlu0 %785, %v780
      %v787 = vpop.permute.xlu0 %786
      %790 = vset.pattern.permute.xlu0 0
      %791 = vperm.xlu0 %790, %v781
      %v792 = vpop.permute.xlu0 %791
      %795 = vset.pattern.permute.xlu0 0
      %796 = vperm.xlu0 %795, %v782
      %v797 = vpop.permute.xlu0 %796
      %800 = vset.pattern.permute.xlu0 0
      %801 = vperm.xlu0 %800, %v783
      %v802 = vpop.permute.xlu0 %801
      %v808 = vunpack.c.l.b16 %v776
      %v809 = vunpack.c.l.b16 %v777
      %v810 = vunpack.c.l.b16 %v778
      %v811 = vunpack.c.l.b16 %v779
      %v812 = vpack.c.b16 %v809, %v808
      %v813 = vpack.c.b16 %v811, %v810
      %vm814 = vcmask 523264
      %v816 = vsel %vm814, %v812, 0
      %v819 = vsel %vm814, %v813, 0
      %821 = vmatprep.subr.bf16.mxu0 %v761
      %822 = vmatpush1.bf16.msra.mxu0 %v760
      %823 = vmatprep.subr.bf16.mxu0 %v765
      %824 = vmatpush1.bf16.msra.mxu0 %v764
      %825 = vmatprep.subr.bf16.mxu0 %v769
      %826 = vmatpush1.bf16.msra.mxu0 %v768
      %827 = vmatprep.subr.bf16.mxu0 %v773
      %828 = vmatpush1.bf16.msra.mxu0 %v772
      %829 = vmatprep.subr.bf16.mxu0 0
      %830 = vmatpush1.bf16.msra.mxu0 0
      %831 = vmatprep.subr.bf16.mxu0 0
      %832 = vmatpush1.bf16.msra.mxu0 0
      %833 = vmatprep.subr.bf16.mxu0 0
      %834 = vmatpush1.bf16.msra.mxu0 0
      %835 = vmatprep.subr.bf16.mxu0 0
      %836 = vmatpush1.bf16.msra.mxu0 0
      %837 = vmatprep.subr.bf16.mxu0 0
      %838 = vmatpush1.bf16.msra.mxu0 0
      %839 = vmatprep.subr.bf16.mxu0 0
      %840 = vmatpush1.bf16.msra.mxu0 0
      %841 = vmatprep.subr.bf16.mxu0 0
      %842 = vmatpush1.bf16.msra.mxu0 0
      %843 = vmatprep.subr.bf16.mxu0 0
      %844 = vmatpush1.bf16.msra.mxu0 0
      %845 = vmatprep.subr.bf16.mxu0 0
      %846 = vmatpush1.bf16.msra.mxu0 0
      %847 = vmatprep.subr.bf16.mxu0 0
      %848 = vmatpush1.bf16.msra.mxu0 0
      %849 = vmatprep.subr.bf16.mxu0 0
      %850 = vmatpush1.bf16.msra.mxu0 0
      %851 = vmatprep.subr.bf16.mxu0 0
      %852 = vmatpush1.bf16.msra.mxu0 0
      %853 = vmatprep.mubr.bf16.mxu0 0
      %854 = vmatmul.mubr.bf16.gmra.mrb[0].mxu0 %v816
      %v855 = vpop.f32.mrb[0].mxu0
      %v856 = vadd.f32 %v787, %v855
      %v857 = vpop.f32.mrb[0].mxu0
      %v858 = vadd.f32 %v787, %v857
      %v859 = vpop.f32.mrb[0].mxu0
      %v860 = vadd.f32 %v792, %v859
      %v861 = vpop.f32.mrb[0].mxu0
      %v862 = vadd.f32 %v792, %v861
      %863 = vmatprep.mubr.bf16.mxu0 0
      %864 = vmatmul.mubr.bf16.gmra.mrb[0].mxu0 %v819
      %v865 = vpop.f32.mrb[0].mxu0
      %v866 = vadd.f32 %v797, %v865
      %v867 = vpop.f32.mrb[0].mxu0
      %v868 = vadd.f32 %v797, %v867
      %v869 = vpop.f32.mrb[0].mxu0
      %v870 = vadd.f32 %v802, %v869
      %v871 = vpop.f32.mrb[0].mxu0
      %v872 = vadd.f32 %v802, %v871
      %873 = vdwg.mxu0
      %874 = vmatprep.subr.bf16.mxu0 %v763
      %875 = vmatpush1.bf16.msra.mxu0 %v762
      %876 = vmatprep.subr.bf16.mxu0 %v767
      %877 = vmatpush1.bf16.msra.mxu0 %v766
      %878 = vmatprep.subr.bf16.mxu0 %v771
      %879 = vmatpush1.bf16.msra.mxu0 %v770
      %880 = vmatprep.subr.bf16.mxu0 %v775
      %881 = vmatpush1.bf16.msra.mxu0 %v774
      %882 = vmatprep.subr.bf16.mxu0 0
      %883 = vmatpush1.bf16.msra.mxu0 0
      %884 = vmatprep.subr.bf16.mxu0 0
      %885 = vmatpush1.bf16.msra.mxu0 0
      %886 = vmatprep.subr.bf16.mxu0 0
      %887 = vmatpush1.bf16.msra.mxu0 0
      %888 = vmatprep.subr.bf16.mxu0 0
      %889 = vmatpush1.bf16.msra.mxu0 0
      %890 = vmatprep.subr.bf16.mxu0 0
      %891 = vmatpush1.bf16.msra.mxu0 0
      %892 = vmatprep.subr.bf16.mxu0 0
      %893 = vmatpush1.bf16.msra.mxu0 0
      %894 = vmatprep.subr.bf16.mxu0 0
      %895 = vmatpush1.bf16.msra.mxu0 0
      %896 = vmatprep.subr.bf16.mxu0 0
      %897 = vmatpush1.bf16.msra.mxu0 0
      %898 = vmatprep.subr.bf16.mxu0 0
      %899 = vmatpush1.bf16.msra.mxu0 0
      %900 = vmatprep.subr.bf16.mxu0 0
      %901 = vmatpush1.bf16.msra.mxu0 0
      %902 = vmatprep.subr.bf16.mxu0 0
      %903 = vmatpush1.bf16.msra.mxu0 0
      %904 = vmatprep.subr.bf16.mxu0 0
      %905 = vmatpush1.bf16.msra.mxu0 0
      %906 = vmatprep.mubr.bf16.mxu0 0
      %907 = vmatmul.mubr.bf16.gmra.mrb[0].mxu0 %v816
      %v908 = vpop.f32.mrb[0].mxu0
      %v909 = vadd.f32 %v787, %v908
      %v910 = vpop.f32.mrb[0].mxu0
      %v911 = vadd.f32 %v787, %v910
      %v912 = vpop.f32.mrb[0].mxu0
      %v913 = vadd.f32 %v792, %v912
      %v914 = vpop.f32.mrb[0].mxu0
      %v915 = vadd.f32 %v792, %v914
      %916 = vmatprep.mubr.bf16.mxu0 0
      %917 = vmatmul.mubr.bf16.gmra.mrb[0].mxu0 %v819
      %v918 = vpop.f32.mrb[0].mxu0
      %v919 = vadd.f32 %v797, %v918
      %v920 = vpop.f32.mrb[0].mxu0
      %v921 = vadd.f32 %v797, %v920
      %v922 = vpop.f32.mrb[0].mxu0
      %v923 = vadd.f32 %v802, %v922
      %v924 = vpop.f32.mrb[0].mxu0
      %v925 = vadd.f32 %v802, %v924
      %926 = vdwg.mxu0
      %v927 = vmax.f32 %v856, 0.0
      %v928 = vmax.f32 %v858, 0.0
      %v929 = vmax.f32 %v909, 0.0
      %v930 = vmax.f32 %v911, 0.0
      %v931 = vmax.f32 %v860, 0.0
      %v932 = vmax.f32 %v862, 0.0
      %v933 = vmax.f32 %v913, 0.0
      %v934 = vmax.f32 %v915, 0.0
      %v935 = vmax.f32 %v866, 0.0
      %v936 = vmax.f32 %v868, 0.0
      %v937 = vmax.f32 %v919, 0.0
      %v938 = vmax.f32 %v921, 0.0
      %v939 = vmax.f32 %v870, 0.0
      %v940 = vmax.f32 %v872, 0.0
      %v941 = vmax.f32 %v923, 0.0
      %v942 = vmax.f32 %v925, 0.0
      %v943 = vpack.c.bf16 %v931, %v927
      %v944 = vpack.c.bf16 %v932, %v928
      %v945 = vpack.c.bf16 %v933, %v929
      %v946 = vpack.c.bf16 %v934, %v930
      %v947 = vpack.c.bf16 %v939, %v935
      %v948 = vpack.c.bf16 %v940, %v936
      %v949 = vpack.c.bf16 %v941, %v937
      %v950 = vpack.c.bf16 %v942, %v938
      %v951 = vld [vmem:[%s1 + $0x30] sm:$0xf]
      %v952 = vld [vmem:[%s1 + $0x34] sm:$0xf]
      %v953 = vld [vmem:[%s2 + $0x60] sm:$0xff]
      %v954 = vld [vmem:[%s2 + $0x68] sm:$0xff]
      %956 = vset.pattern.permute.xlu0 0
      %957 = vperm.xlu0 %956, %v953
      %v958 = vpop.permute.xlu0 %957
      %961 = vset.pattern.permute.xlu0 0
      %962 = vperm.xlu0 %961, %v954
      %v963 = vpop.permute.xlu0 %962
      %v967 = vunpack.c.l.b16 %v951
      %v968 = vunpack.c.l.b16 %v952
      %v969 = vpack.c.b16 %v968, %v967
      %vm970 = vcmask 261120
      %v972 = vsel %vm970, %v969, 0
      %974 = vmatprep.subr.bf16.mxu0 %v944
      %975 = vmatpush1.bf16.msra.mxu0 %v943
      %976 = vmatprep.subr.bf16.mxu0 %v948
      %977 = vmatpush1.bf16.msra.mxu0 %v947
      %978 = vmatprep.subr.bf16.mxu0 0
      %979 = vmatpush1.bf16.msra.mxu0 0
      %980 = vmatprep.subr.bf16.mxu0 0
      %981 = vmatpush1.bf16.msra.mxu0 0
      %982 = vmatprep.subr.bf16.mxu0 0
      %983 = vmatpush1.bf16.msra.mxu0 0
      %984 = vmatprep.subr.bf16.mxu0 0
      %985 = vmatpush1.bf16.msra.mxu0 0
      %986 = vmatprep.subr.bf16.mxu0 0
      %987 = vmatpush1.bf16.msra.mxu0 0
      %988 = vmatprep.subr.bf16.mxu0 0
      %989 = vmatpush1.bf16.msra.mxu0 0
      %990 = vmatprep.subr.bf16.mxu0 0
      %991 = vmatpush1.bf16.msra.mxu0 0
      %992 = vmatprep.subr.bf16.mxu0 0
      %993 = vmatpush1.bf16.msra.mxu0 0
      %994 = vmatprep.subr.bf16.mxu0 0
      %995 = vmatpush1.bf16.msra.mxu0 0
      %996 = vmatprep.subr.bf16.mxu0 0
      %997 = vmatpush1.bf16.msra.mxu0 0
      %998 = vmatprep.subr.bf16.mxu0 0
      %999 = vmatpush1.bf16.msra.mxu0 0
      %1000 = vmatprep.subr.bf16.mxu0 0
      %1001 = vmatpush1.bf16.msra.mxu0 0
      %1002 = vmatprep.subr.bf16.mxu0 0
      %1003 = vmatpush1.bf16.msra.mxu0 0
      %1004 = vmatprep.subr.bf16.mxu0 0
      %1005 = vmatpush1.bf16.msra.mxu0 0
      %1006 = vmatprep.mubr.bf16.mxu0 0
      %1007 = vmatmul.mubr.bf16.gmra.mrb[0].mxu0 %v972
      %v1008 = vpop.f32.mrb[0].mxu0
      %v1009 = vadd.f32 %v958, %v1008
      %v1010 = vpop.f32.mrb[0].mxu0
      %v1011 = vadd.f32 %v958, %v1010
      %v1012 = vpop.f32.mrb[0].mxu0
      %v1013 = vadd.f32 %v963, %v1012
      %v1014 = vpop.f32.mrb[0].mxu0
      %v1015 = vadd.f32 %v963, %v1014
      %1016 = vdwg.mxu0
      %1017 = vmatprep.subr.bf16.mxu0 %v946
      %1018 = vmatpush1.bf16.msra.mxu0 %v945
      %1019 = vmatprep.subr.bf16.mxu0 %v950
      %1020 = vmatpush1.bf16.msra.mxu0 %v949
      %1021 = vmatprep.subr.bf16.mxu0 0
      %1022 = vmatpush1.bf16.msra.mxu0 0
      %1023 = vmatprep.subr.bf16.mxu0 0
      %1024 = vmatpush1.bf16.msra.mxu0 0
      %1025 = vmatprep.subr.bf16.mxu0 0
      %1026 = vmatpush1.bf16.msra.mxu0 0
      %1027 = vmatprep.subr.bf16.mxu0 0
      %1028 = vmatpush1.bf16.msra.mxu0 0
      %1029 = vmatprep.subr.bf16.mxu0 0
      %1030 = vmatpush1.bf16.msra.mxu0 0
      %1031 = vmatprep.subr.bf16.mxu0 0
      %1032 = vmatpush1.bf16.msra.mxu0 0
      %1033 = vmatprep.subr.bf16.mxu0 0
      %1034 = vmatpush1.bf16.msra.mxu0 0
      %1035 = vmatprep.subr.bf16.mxu0 0
      %1036 = vmatpush1.bf16.msra.mxu0 0
      %1037 = vmatprep.subr.bf16.mxu0 0
      %1038 = vmatpush1.bf16.msra.mxu0 0
      %1039 = vmatprep.subr.bf16.mxu0 0
      %1040 = vmatpush1.bf16.msra.mxu0 0
      %1041 = vmatprep.subr.bf16.mxu0 0
      %1042 = vmatpush1.bf16.msra.mxu0 0
      %1043 = vmatprep.subr.bf16.mxu0 0
      %1044 = vmatpush1.bf16.msra.mxu0 0
      %1045 = vmatprep.subr.bf16.mxu0 0
      %1046 = vmatpush1.bf16.msra.mxu0 0
      %1047 = vmatprep.subr.bf16.mxu0 0
      %1048 = vmatpush1.bf16.msra.mxu0 0
      %1049 = vmatprep.mubr.bf16.mxu0 0
      %1050 = vmatmul.mubr.bf16.gmra.mrb[0].mxu0 %v972
      %v1051 = vpop.f32.mrb[0].mxu0
      %v1052 = vadd.f32 %v958, %v1051
      %v1053 = vpop.f32.mrb[0].mxu0
      %v1054 = vadd.f32 %v958, %v1053
      %v1055 = vpop.f32.mrb[0].mxu0
      %v1056 = vadd.f32 %v963, %v1055
      %v1057 = vpop.f32.mrb[0].mxu0
      %v1058 = vadd.f32 %v963, %v1057
      %1059 = vdwg.mxu0
      %v1060 = vmax.f32 %v1009, 0.0
      %v1061 = vmax.f32 %v1011, 0.0
      %v1062 = vmax.f32 %v1052, 0.0
      %v1063 = vmax.f32 %v1054, 0.0
      %v1064 = vmax.f32 %v1013, 0.0
      %v1065 = vmax.f32 %v1015, 0.0
      %v1066 = vmax.f32 %v1056, 0.0
      %v1067 = vmax.f32 %v1058, 0.0
      %v1068 = vpack.c.bf16 %v1064, %v1060
      %v1069 = vpack.c.bf16 %v1065, %v1061
      %v1070 = vpack.c.bf16 %v1066, %v1062
      %v1071 = vpack.c.bf16 %v1067, %v1063
      %v1072 = vld [vmem:[%s1 + $0x38] sm:$0xf]
      %v1073 = vld [vmem:[%s1 + $0x3c] sm:$0xf]
      %v1074 = vld [vmem:[%s2 + $0x70] sm:$0xff]
      %v1075 = vld [vmem:[%s2 + $0x78] sm:$0xff]
      %1077 = vset.pattern.permute.xlu0 0
      %1078 = vperm.xlu0 %1077, %v1074
      %v1079 = vpop.permute.xlu0 %1078
      %1082 = vset.pattern.permute.xlu0 0
      %1083 = vperm.xlu0 %1082, %v1075
      %v1084 = vpop.permute.xlu0 %1083
      %v1088 = vunpack.c.l.b16 %v1072
      %v1089 = vunpack.c.l.b16 %v1073
      %v1090 = vpack.c.b16 %v1089, %v1088
      %v1092 = vsel %vm473, %v1090, 0
      %1094 = vmatprep.subr.bf16.mxu0 %v1069
      %1095 = vmatpush1.bf16.msra.mxu0 %v1068
      %1096 = vmatprep.subr.bf16.mxu0 0
      %1097 = vmatpush1.bf16.msra.mxu0 0
      %1098 = vmatprep.subr.bf16.mxu0 0
      %1099 = vmatpush1.bf16.msra.mxu0 0
      %1100 = vmatprep.subr.bf16.mxu0 0
      %1101 = vmatpush1.bf16.msra.mxu0 0
      %1102 = vmatprep.subr.bf16.mxu0 0
      %1103 = vmatpush1.bf16.msra.mxu0 0
      %1104 = vmatprep.subr.bf16.mxu0 0
      %1105 = vmatpush1.bf16.msra.mxu0 0
      %1106 = vmatprep.subr.bf16.mxu0 0
      %1107 = vmatpush1.bf16.msra.mxu0 0
      %1108 = vmatprep.subr.bf16.mxu0 0
      %1109 = vmatpush1.bf16.msra.mxu0 0
      %1110 = vmatprep.subr.bf16.mxu0 0
      %1111 = vmatpush1.bf16.msra.mxu0 0
      %1112 = vmatprep.subr.bf16.mxu0 0
      %1113 = vmatpush1.bf16.msra.mxu0 0
      %1114 = vmatprep.subr.bf16.mxu0 0
      %1115 = vmatpush1.bf16.msra.mxu0 0
      %1116 = vmatprep.subr.bf16.mxu0 0
      %1117 = vmatpush1.bf16.msra.mxu0 0
      %1118 = vmatprep.subr.bf16.mxu0 0
      %1119 = vmatpush1.bf16.msra.mxu0 0
      %1120 = vmatprep.subr.bf16.mxu0 0
      %1121 = vmatpush1.bf16.msra.mxu0 0
      %1122 = vmatprep.subr.bf16.mxu0 0
      %1123 = vmatpush1.bf16.msra.mxu0 0
      %1124 = vmatprep.subr.bf16.mxu0 0
      %1125 = vmatpush1.bf16.msra.mxu0 0
      %1126 = vmatprep.mubr.bf16.mxu0 0
      %1127 = vmatmul.mubr.bf16.gmra.mrb[0].mxu0 %v1092
      %v1128 = vpop.f32.mrb[0].mxu0
      %v1129 = vadd.f32 %v1079, %v1128
      %v1130 = vpop.f32.mrb[0].mxu0
      %v1131 = vadd.f32 %v1079, %v1130
      %v1132 = vpop.f32.mrb[0].mxu0
      %v1133 = vadd.f32 %v1084, %v1132
      %v1134 = vpop.f32.mrb[0].mxu0
      %v1135 = vadd.f32 %v1084, %v1134
      %1136 = vdwg.mxu0
      %1137 = vmatprep.subr.bf16.mxu0 %v1071
      %1138 = vmatpush1.bf16.msra.mxu0 %v1070
      %1139 = vmatprep.subr.bf16.mxu0 0
      %1140 = vmatpush1.bf16.msra.mxu0 0
      %1141 = vmatprep.subr.bf16.mxu0 0
      %1142 = vmatpush1.bf16.msra.mxu0 0
      %1143 = vmatprep.subr.bf16.mxu0 0
      %1144 = vmatpush1.bf16.msra.mxu0 0
      %1145 = vmatprep.subr.bf16.mxu0 0
      %1146 = vmatpush1.bf16.msra.mxu0 0
      %1147 = vmatprep.subr.bf16.mxu0 0
      %1148 = vmatpush1.bf16.msra.mxu0 0
      %1149 = vmatprep.subr.bf16.mxu0 0
      %1150 = vmatpush1.bf16.msra.mxu0 0
      %1151 = vmatprep.subr.bf16.mxu0 0
      %1152 = vmatpush1.bf16.msra.mxu0 0
      %1153 = vmatprep.subr.bf16.mxu0 0
      %1154 = vmatpush1.bf16.msra.mxu0 0
      %1155 = vmatprep.subr.bf16.mxu0 0
      %1156 = vmatpush1.bf16.msra.mxu0 0
      %1157 = vmatprep.subr.bf16.mxu0 0
      %1158 = vmatpush1.bf16.msra.mxu0 0
      %1159 = vmatprep.subr.bf16.mxu0 0
      %1160 = vmatpush1.bf16.msra.mxu0 0
      %1161 = vmatprep.subr.bf16.mxu0 0
      %1162 = vmatpush1.bf16.msra.mxu0 0
      %1163 = vmatprep.subr.bf16.mxu0 0
      %1164 = vmatpush1.bf16.msra.mxu0 0
      %1165 = vmatprep.subr.bf16.mxu0 0
      %1166 = vmatpush1.bf16.msra.mxu0 0
      %1167 = vmatprep.subr.bf16.mxu0 0
      %1168 = vmatpush1.bf16.msra.mxu0 0
      %1169 = vmatprep.mubr.bf16.mxu0 0
      %1170 = vmatmul.mubr.bf16.gmra.mrb[0].mxu0 %v1092
      %v1171 = vpop.f32.mrb[0].mxu0
      %v1172 = vadd.f32 %v1079, %v1171
      %v1173 = vpop.f32.mrb[0].mxu0
      %v1174 = vadd.f32 %v1079, %v1173
      %v1175 = vpop.f32.mrb[0].mxu0
      %v1176 = vadd.f32 %v1084, %v1175
      %v1177 = vpop.f32.mrb[0].mxu0
      %v1178 = vadd.f32 %v1084, %v1177
      %1179 = vdwg.mxu0
      %v1180 = vmax.f32 %v1129, 0.0
      %v1181 = vmax.f32 %v1131, 0.0
      %v1182 = vmax.f32 %v1172, 0.0
      %v1183 = vmax.f32 %v1174, 0.0
      %v1184 = vmax.f32 %v1133, 0.0
      %v1185 = vmax.f32 %v1135, 0.0
      %v1186 = vmax.f32 %v1176, 0.0
      %v1187 = vmax.f32 %v1178, 0.0
      %v1188 = vld [vmem:[%s2 + $0x80] sm:$0xff]
      %v1189 = vld [vmem:[%s2 + $0x88] sm:$0xff]
      %1191 = vset.pattern.permute.xlu0 0
      %1192 = vperm.xlu0 %1191, %v1188
      %v1193 = vpop.permute.xlu0 %1192
      %1196 = vset.pattern.permute.xlu0 0
      %1197 = vperm.xlu0 %1196, %v1189
      %v1198 = vpop.permute.xlu0 %1197
      %v1200 = vmul.f32 %v1193, %v1180
      %v1201 = vmul.f32 %v1193, %v1181
      %v1202 = vmul.f32 %v1193, %v1182
      %v1203 = vmul.f32 %v1193, %v1183
      %v1204 = vmul.f32 %v1198, %v1184
      %v1205 = vmul.f32 %v1198, %v1185
      %v1206 = vmul.f32 %v1198, %v1186
      %v1207 = vmul.f32 %v1198, %v1187
      %v1208 = vadd.f32 %v1200, %v1204
      %v1209 = vrot.slane %v1208, 4
      %v1210 = vadd.f32 %v1208, %v1209
      %v1211 = vrot.slane %v1210, 2
      %v1212 = vadd.f32 %v1210, %v1211
      %v1213 = vrot.slane %v1212, 1
      %v1214 = vadd.f32 %v1212, %v1213
      %v1215 = vadd.f32 %v1201, %v1205
      %v1216 = vrot.slane %v1215, 4
      %v1217 = vadd.f32 %v1215, %v1216
      %v1218 = vrot.slane %v1217, 2
      %v1219 = vadd.f32 %v1217, %v1218
      %v1220 = vrot.slane %v1219, 1
      %v1221 = vadd.f32 %v1219, %v1220
      %v1222 = vadd.f32 %v1202, %v1206
      %v1223 = vrot.slane %v1222, 4
      %v1224 = vadd.f32 %v1222, %v1223
      %v1225 = vrot.slane %v1224, 2
      %v1226 = vadd.f32 %v1224, %v1225
      %v1227 = vrot.slane %v1226, 1
      %v1228 = vadd.f32 %v1226, %v1227
      %v1229 = vadd.f32 %v1203, %v1207
      %v1230 = vrot.slane %v1229, 4
      %v1231 = vadd.f32 %v1229, %v1230
      %v1232 = vrot.slane %v1231, 2
      %v1233 = vadd.f32 %v1231, %v1232
      %v1234 = vrot.slane %v1233, 1
      %v1235 = vadd.f32 %v1233, %v1234
      %v1236 = vld [vmem:[%s2 + $0x90] sm:$0x1]
      %1238 = vset.pattern.permute.xlu0 0
      %1239 = vperm.xlu0 %1238, %v1236
      %v1240 = vpop.permute.xlu0 %1239
      %v1242 = vadd.f32 %v1214, %v1240
      %v1243 = vadd.f32 %v1221, %v1240
      %v1244 = vadd.f32 %v1228, %v1240
      %v1245 = vadd.f32 %v1235, %v1240
      %v1250 = vcombine.low %v1242, %v1243
      %v1251 = vcombine.low %v1244, %v1245
      %v1253 = vunpack.c.l.s4 1966171168
      %v1254 = vunpack.c.0.s8 %v1253
      %v1255 = vlaneseq
      %v1256 = vshrl.u32 %v1255, 7
      %v1257 = vsub.s32 %v1254, %v1256
      %v1258 = vrot.slane %v1250, %v1257
      %v1260 = vunpack.c.l.s4 1966171168
      %v1261 = vunpack.c.0.s8 %v1260
      %v1262 = vlaneseq
      %v1263 = vshrl.u32 %v1262, 7
      %v1264 = vsub.s32 %v1261, %v1263
      %v1265 = vrot.slane %v1251, %v1264
      %v1266 = vcombine.low %v1258, %v1265
      %v1268 = vunpack.c.l.s4 1966171168
      %v1269 = vunpack.c.0.s8 %v1268
      %v1270 = vlaneseq
      %v1271 = vshrl.u32 %v1270, 7
      %v1272 = vsub.s32 %v1269, %v1271
      %v1273 = vrot.slane %v1266, %v1272
      %v1275 = vlaneseq
      %vm1276 = vcmp.ge.s32.totalorder %v1275, 0
      %vm1277 = vcmp.lt.s32.totalorder %v1275, 512
      %vm1278 = vmand %vm1276, %vm1277
      %1279 = vst.msk [vmem:[%s170] sm:$0xf] %vm1278, %v1273
      %s1280 = smul.u32 4, %s14
      %p1281 = scmp.lt.s32.totalorder %s1280, 7
      %s1282 = scalar_select %p1281, %s1280, 7
      %s1283 = scalar_lea.vmem %s3, %s1282
      // Predicated region
      $region33: #{mlp_forward.1} parent=31 // pred_check
        %p1284 = pneg %p100
      $region34: #{mlp_forward.1} parent=31 // pred_check_branch
        %1286 = sbr.rel (%p1284) target = $region36
      $region35: #{mlp_forward.1} parent=31 // pred_region
        %s1287 = smul.u32 4, %s14
      $region36: #{mlp_forward.1} parent=31 // pred_fallthru
        _
    $region32: #{mlp_forward.1} parent=5 // pred_fallthru
      _
    %p1288 = scmp.le.s32.totalorder 2, %s9
    // Predicated region
    $region37: #{mlp_forward.1} parent=5 // pred_check
      %p1289 = pneg %p1288
    $region38: #{mlp_forward.1} parent=5 // pred_check_branch
      %1291 = sbr.rel (%p1289) target = $region40
    $region39: #{mlp_forward.1} parent=5 // pred_region
      %s1292 = ssub.s32 %s9, 2
      // Predicated region
      $region41: #{mlp_forward.1} parent=39 // pred_check
        %p1293 = pneg %p106
      $region42: #{mlp_forward.1} parent=39 // pred_check_branch
        %1295 = sbr.rel (%p1293) target = $region44
      $region43: #{mlp_forward.1} parent=39 // pred_region
        %s1296 = smul.u32 4, %s15
        %p1297 = scmp.lt.s32.totalorder %s1296, 7
        %s1298 = scalar_select %p1297, %s1296, 7
        %s1299 = scalar_lea.vmem %s3, %s1298
      $region44: #{mlp_forward.1} parent=39 // pred_fallthru
        _
    $region40: #{mlp_forward.1} parent=5 // pred_fallthru
      _
  $region6: #{mlp_forward.1} parent=0 // loop_footer
    %s13 = sadd.s32 1, %s9
  $region7: #{mlp_forward.1} parent=0 // loop_footer_branch
    %8 = sbr.rel target = $region3
  $region8: #{mlp_forward.1} parent=0 // loop_exit
    _

</llo_original>
